<compile_context>
chip_gen: v5e
topology: v5e:2x2
jax: 0.10.0
libtpu: 0.0.40
codegen_flags: <defaults>
</compile_context>

<pallas_src>
import jax
import jax.numpy as jnp
from jax.experimental import pallas as pl
from jax.experimental.pallas import tpu as pltpu

IN_FEATURES = 10
OUT_FEATURES = 20


def _model_kernel(x_ref, wsum_ref, o_ref):
    # x_ref    : (B, IN_FEATURES)    f32 in VMEM
    # wsum_ref : (1, OUT_FEATURES)   f32 in VMEM  (weight.sum(axis=1))
    # o_ref    : (B, OUT_FEATURES)   f32 in VMEM
    x = x_ref[...]
    m = jnp.mean(x, axis=-1, keepdims=True)            # (B, 1)  cross-lane reduce (XLU)
    # rank-1 outer product on the VPU: (B,1) * (1,OUT) -> (B,OUT)
    o_ref[...] = jnp.clip(m * wsum_ref[...] + 3.0, 0.0, 6.0)


def model_forward(x, weight):
    """x: (B, 10) f32; weight: (20, 10) f32 (native PyTorch Linear layout)."""
    B = x.shape[0]
    # Precompute the per-output-channel column sum; replaces the whole matmul.
    wsum = jnp.sum(weight, axis=1).reshape(1, OUT_FEATURES)   # (1, 20)
    return pl.pallas_call(
        _model_kernel,
        out_shape=jax.ShapeDtypeStruct((B, OUT_FEATURES), jnp.float32),
        in_specs=[
            pl.BlockSpec(memory_space=pltpu.MemorySpace.VMEM),
            pl.BlockSpec(memory_space=pltpu.MemorySpace.VMEM),
        ],
        out_specs=pl.BlockSpec(memory_space=pltpu.MemorySpace.VMEM),
        compiler_params=pltpu.CompilerParams(vmem_limit_bytes=4 << 20),
        cost_estimate=pl.CostEstimate(
            flops=2 * B * OUT_FEATURES,
            transcendentals=0,
            bytes_accessed=4 * (B * IN_FEATURES + OUT_FEATURES + B * OUT_FEATURES),
        ),
    )(x, wsum)


if __name__ == "__main__":
    key = jax.random.PRNGKey(0)
    kx, kw = jax.random.split(key)

    # Inputs consistent with the module: x1 = torch.randn(32, 10)
    x = jax.random.normal(kx, (32, IN_FEATURES), dtype=jnp.float32)

    # Deterministic init of the Linear(10, 20, bias=False) weight, shape (20, 10)
    bound = 1.0 / (IN_FEATURES ** 0.5)
    weight = jax.random.uniform(
        kw, (OUT_FEATURES, IN_FEATURES), dtype=jnp.float32,
        minval=-bound, maxval=bound)

    out = jax.jit(model_forward)(x, weight)
    out = jax.block_until_ready(out)

    # Plain-JAX reference of the same (broadcast-repaired) semantics
    m = jnp.mean(x, axis=-1, keepdims=True)
    ref = jnp.clip(jnp.broadcast_to(m, x.shape) @ weight.T + 3.0, 0.0, 6.0)
    assert out.shape == (32, OUT_FEATURES)
    assert jnp.allclose(out, ref, atol=1e-5, rtol=1e-5)

    print("KERNEL_OK")
</pallas_src>

<mosaic_0001>
module attributes {stable_mosaic.version = 11 : i64} {
  func.func @_model_kernel(%arg0: memref<32x10xf32, #tpu.memory_space<vmem>>, %arg1: memref<1x20xf32, #tpu.memory_space<vmem>>, %arg2: memref<32x20xf32, #tpu.memory_space<vmem>>) attributes {dimension_semantics = [], scalar_prefetch = 0 : i64, scratch_operands = 0 : i64, tpu.core_type = #tpu.core_type<tc>} {
    %c0 = arith.constant 0 : index
    %c0_0 = arith.constant 0 : index
    %0 = vector.load %arg0[%c0, %c0_0] : memref<32x10xf32, #tpu.memory_space<vmem>>, vector<32x10xf32>
    %cst = arith.constant dense<0.000000e+00> : vector<32xf32>
    %1 = vector.multi_reduction <add>, %0, %cst [1] : vector<32x10xf32> to vector<32xf32>
    %2 = vector.shape_cast %1 : vector<32xf32> to vector<32x1xf32>
    %cst_1 = arith.constant 1.000000e+01 : f32
    %3 = vector.broadcast %cst_1 : f32 to vector<32x1xf32>
    %4 = arith.divf %2, %3 : vector<32x1xf32>
    %c0_2 = arith.constant 0 : index
    %c0_3 = arith.constant 0 : index
    %5 = vector.load %arg1[%c0_2, %c0_3] : memref<1x20xf32, #tpu.memory_space<vmem>>, vector<1x20xf32>
    %6 = vector.broadcast %4 : vector<32x1xf32> to vector<32x20xf32>
    %7 = vector.broadcast %5 : vector<1x20xf32> to vector<32x20xf32>
    %8 = arith.mulf %6, %7 : vector<32x20xf32>
    %cst_4 = arith.constant 3.000000e+00 : f32
    %9 = vector.broadcast %cst_4 : f32 to vector<32x20xf32>
    %10 = arith.addf %8, %9 : vector<32x20xf32>
    %cst_5 = arith.constant 0.000000e+00 : f32
    %cst_6 = arith.constant 6.000000e+00 : f32
    %11 = vector.broadcast %cst_5 : f32 to vector<32x20xf32>
    %12 = arith.maximumf %11, %10 : vector<32x20xf32>
    %13 = vector.broadcast %cst_6 : f32 to vector<32x20xf32>
    %14 = arith.minimumf %13, %12 : vector<32x20xf32>
    %c0_7 = arith.constant 0 : index
    %c0_8 = arith.constant 0 : index
    %15 = vector.load %arg2[%c0_7, %c0_8] : memref<32x20xf32, #tpu.memory_space<vmem>>, vector<32x20xf32>
    tpu.vector_store %arg2[%c0_7, %c0_8], %14 {strides = array<i32>} : memref<32x20xf32, #tpu.memory_space<vmem>>, vector<32x20xf32>,
    return
  }
}

</mosaic_0001>

<llo_original>
// kernel: model_forward.1
$region0: #{model_forward.1}
  #allocation0 [shape = 'u32[]', space=smem, size = 0x4, offset = 0x4, fixed_abs, tag = 'smem constant byte address 0x4 - core index']
  #allocation1 [shape = 'u32[72,128]{1,0:T(1,128)}', space=vmem, size = 0x9000, scoped, tag = 'internal scratch']
  %s0 = inlined_call_operand.vmem [shape: f32[32,10], index: 0, kind: input, shape index: {}]
  %s1 = inlined_call_operand.vmem [shape: f32[1,20], index: 1, kind: input, shape index: {}]
  %s2 = inlined_call_operand.vmem [shape: f32[32,20], index: 2, kind: output, shape index: {}]
  %s3 = sld [smem:[#allocation0]]
  $region18: #{model_forward.1} parent=0
    _
  %s5 = ssub.s32 1, %s3
  %s6 = scalar_select 0, %s5, %s3
  // Predicated region
  $region2: #{model_forward.1} parent=0 // pred_check
    _
  $region3: #{model_forward.1} parent=0 // pred_check_branch
    %8 = sbr.rel (0) target = $region5
  $region4: #{model_forward.1} parent=0 // pred_region
    _
  $region5: #{model_forward.1} parent=0 // pred_fallthru
    _
  // Predicated region
  $region6: #{model_forward.1} parent=0 // pred_check
    _
  $region7: #{model_forward.1} parent=0 // pred_check_branch
    %10 = sbr.rel (0) target = $region9
  $region8: #{model_forward.1} parent=0 // pred_region
    _
  $region9: #{model_forward.1} parent=0 // pred_fallthru
    _
  %v11 = vld [vmem:[%s0] sm:$0xff]
  %v12 = vld [vmem:[%s0 + $0x8] sm:$0xff]
  %v13 = vld [vmem:[%s0 + $0x10] sm:$0xff]
  %v14 = vld [vmem:[%s0 + $0x18] sm:$0xff]
  %vm15 = vcmask 80896
  %v16 = vsel %vm15, %v11, 0.0
  %17 = vadd.xlane.f32.xlu0 %v16
  %v18 = vpop.xlane.xlu0 %17
  %v19 = vsel %vm15, %v12, 0.0
  %20 = vadd.xlane.f32.xlu0 %v19
  %v21 = vpop.xlane.xlu0 %20
  %v22 = vsel %vm15, %v13, 0.0
  %23 = vadd.xlane.f32.xlu0 %v22
  %v24 = vpop.xlane.xlu0 %23
  %v25 = vsel %vm15, %v14, 0.0
  %26 = vadd.xlane.f32.xlu0 %v25
  %v27 = vpop.xlane.xlu0 %26
  %v28 = vrcp.pop 10.0
  %v29 = vmul.f32 10.0, %v28
  %v30 = vsub.f32 1.0, %v29
  %v31 = vmul.f32 %v28, %v30
  %v32 = vadd.f32 %v28, %v31
  %vm33 = vweird.f32 %v28
  %v34 = vsel %vm33, %v28, %v32
  %v35 = vmul.f32 %v18, %v34
  %v36 = vmul.f32 %v21, %v34
  %v37 = vmul.f32 %v24, %v34
  %v38 = vmul.f32 %v27, %v34
  %v39 = vld [vmem:[%s1] sm:$0x1]
  %v41 = vperm.slane %v39, 0
  %v43 = vmul.f32 %v35, %v41
  %v44 = vmul.f32 %v36, %v41
  %v45 = vmul.f32 %v37, %v41
  %v46 = vmul.f32 %v38, %v41
  %v47 = vadd.f32 %v43, 3.0
  %v48 = vadd.f32 %v44, 3.0
  %v49 = vadd.f32 %v45, 3.0
  %v50 = vadd.f32 %v46, 3.0
  %v51 = vmax.f32 %v47, 0.0
  %v52 = vmax.f32 %v48, 0.0
  %v53 = vmax.f32 %v49, 0.0
  %v54 = vmax.f32 %v50, 0.0
  %v55 = vmin.f32 %v51, 6.0
  %v56 = vmin.f32 %v52, 6.0
  %v57 = vmin.f32 %v53, 6.0
  %v58 = vmin.f32 %v54, 6.0
  %vm59 = vcmask 162816
  %60 = vst.msk [vmem:[%s2] sm:$0xff] %vm59, %v55
  %61 = vst.msk [vmem:[%s2 + $0x8] sm:$0xff] %vm59, %v56
  %62 = vst.msk [vmem:[%s2 + $0x10] sm:$0xff] %vm59, %v57
  %63 = vst.msk [vmem:[%s2 + $0x18] sm:$0xff] %vm59, %v58
  // Predicated region
  $region10: #{model_forward.1} parent=0 // pred_check
    _
  $region11: #{model_forward.1} parent=0 // pred_check_branch
    %65 = sbr.rel (0) target = $region13
  $region12: #{model_forward.1} parent=0 // pred_region
    _
  $region13: #{model_forward.1} parent=0 // pred_fallthru
    _
  // Predicated region
  $region14: #{model_forward.1} parent=0 // pred_check
    _
  $region15: #{model_forward.1} parent=0 // pred_check_branch
    %67 = sbr.rel (0) target = $region17
  $region16: #{model_forward.1} parent=0 // pred_region
    _
  $region17: #{model_forward.1} parent=0 // pred_fallthru
    _

</llo_original>
